<compile_context>
chip_gen: v7x
topology: tpu7x:2x2x1
jax: 0.10.0
libtpu: 0.0.40
codegen_flags: <defaults>
</compile_context>

<pallas_src>
import numpy as np
import jax
import jax.numpy as jnp
from jax.experimental import pallas as pl
from jax.experimental.pallas import tpu as pltpu


# --------------------------------------------------------------------------
# Pallas kernel: fused Conv(k=2,3,4) + ReLU + max-over-time for TB batch items
# --------------------------------------------------------------------------
def textcnn_conv_kernel(x_ref, w_ref, b_ref, m_ref, out_ref):
    # x_ref : (L, TB, KE)   bf16 im2col windows, KE = 4*E (taps concatenated on lanes)
    # w_ref : (KE, Cpad)    bf16 fused conv weights (zero-padded taps + zero pad columns)
    # b_ref : (1, Cpad)     f32 biases [b2 | b3 | b4 | 0-pad]
    # m_ref : (3, 1, Cpad)  f32 additive validity mask (0 / -inf) for the last 3 positions
    # out_ref: (TB, Cpad)   f32 pooled features
    L, TB, KE = x_ref.shape
    Cpad = w_ref.shape[1]

    # One full-depth matmul: M = L*TB, K = 4*E, N = Cpad.
    x = x_ref[...].reshape(L * TB, KE)            # aligned leading-dim merge (TB % 16 == 0)
    acc = jnp.dot(x, w_ref[...], preferred_element_type=jnp.float32)
    acc = acc.reshape(L, TB, Cpad)                # aligned split

    # Split-range max over time: rows 0..L-4 are valid for every branch; the last 3 rows
    # get a per-branch -inf additive mask (a window running past the end must not win the
    # max even after bias, hence -inf and not 0).
    head = jnp.max(acc[: L - 3], axis=0)                       # (TB, Cpad)
    tail = jnp.max(acc[L - 3:] + m_ref[...], axis=0)           # (TB, Cpad)
    pooled = jnp.maximum(head, tail)

    # bias-add and ReLU commute with the max (both monotone), so apply once on pooled value
    pooled = jnp.maximum(pooled + b_ref[...], 0.0)
    out_ref[...] = pooled.astype(out_ref.dtype)


# --------------------------------------------------------------------------
# One-time parameter packing (hoisted out of the per-call path)
# --------------------------------------------------------------------------
def init_textcnn_params(emb, W2, b2, W3, b3, W4, b4, fcW, fcb, pad_idx):
    """emb: (V, E) embedding table.  W_k: (F, k, E) PyTorch conv weights (in-channel
    squeezed), b_k: (F,).  fcW: (C, 3F), fcb: (C,).  pad_idx: embedding padding index."""
    V, E = emb.shape
    F = W2.shape[0]
    F3 = 3 * F
    C = fcW.shape[0]
    Cpad = pl.cdiv(F3, 128) * 128          # lane-dense output width
    KE = 4 * E

    # Fused, zero-padded conv weight: rows are (tap dk, embed e) -> dk*E + e,
    # columns are [filters k=2 | k=3 | k=4 | zero pad].  Branch k uses taps 0..k-1.
    wf = jnp.zeros((4, E, Cpad), jnp.float32)
    wf = wf.at[0:2, :, 0 * F:1 * F].set(jnp.transpose(W2, (1, 2, 0)))
    wf = wf.at[0:3, :, 1 * F:2 * F].set(jnp.transpose(W3, (1, 2, 0)))
    wf = wf.at[0:4, :, 2 * F:3 * F].set(jnp.transpose(W4, (1, 2, 0)))
    wf16 = wf.reshape(KE, Cpad).astype(jnp.bfloat16)

    bf = jnp.zeros((1, Cpad), jnp.float32).at[0, :F3].set(
        jnp.concatenate([b2, b3, b4]))

    # Additive validity mask for the last 3 conv positions: tail row r is position L-3+r,
    # branch k is valid there iff k <= 3 - r.  Pad columns stay valid (they are all-zero
    # and the FC pad rows are zero, so they contribute nothing).
    mask_np = np.zeros((3, 1, Cpad), np.float32)
    for r in range(3):
        for j, k in enumerate((2, 3, 4)):
            if k > 3 - r:
                mask_np[r, 0, j * F:(j + 1) * F] = -np.inf
    mask = jnp.asarray(mask_np)

    fcw_pad = jnp.zeros((Cpad, C), jnp.float32).at[:F3, :].set(fcW.T)

    return dict(emb=emb.astype(jnp.bfloat16), wf=wf16, bf=bf, mask=mask,
                fcw=fcw_pad, fcb=fcb, pad_idx=pad_idx)


# --------------------------------------------------------------------------
# Forward: token ids -> logits
# --------------------------------------------------------------------------
def textcnn_forward(token_ids, params, *, block_b=128):
    """token_ids: (B, L) int32 (== x[0] of the PyTorch forward).  Returns (B, C) f32."""
    emb, wf, bf = params["emb"], params["wf"], params["bf"]
    mask, fcw, fcb = params["mask"], params["fcw"], params["fcb"]
    pad_idx = params["pad_idx"]

    B, L = token_ids.shape
    KE, Cpad = wf.shape
    assert L >= 4, "sequence length must be >= largest conv kernel (4)"
    block_b = min(block_b, B)
    assert B % block_b == 0 and block_b % 16 == 0

    # Position-major im2col built directly from the embedding gather (bf16 table):
    # x_win[t, b, dk*E:(dk+1)*E] = emb[token at position t+dk]  (padding tokens past the end;
    # those windows are masked with -inf in the kernel).
    ids_t = jnp.concatenate(
        [token_ids.T, jnp.full((3, B), pad_idx, token_ids.dtype)], axis=0)  # (L+3, B)
    ids_win = jnp.stack([ids_t[dk:dk + L] for dk in range(4)], axis=2)      # (L, B, 4)
    x_win = emb[ids_win].reshape(L, B, KE)                                  # (L, B, 4E) bf16

    pooled = pl.pallas_call(
        textcnn_conv_kernel,
        out_shape=jax.ShapeDtypeStruct((B, Cpad), jnp.float32),
        grid_spec=pltpu.PrefetchScalarGridSpec(
            num_scalar_prefetch=0,
            grid=(B // block_b,),
            in_specs=[
                pl.BlockSpec((L, block_b, KE), lambda i: (0, i, 0)),  # batch-blocked im2col
                pl.BlockSpec((KE, Cpad), lambda i: (0, 0)),           # block-resident weights
                pl.BlockSpec((1, Cpad), lambda i: (0, 0)),            # block-resident bias
                pl.BlockSpec((3, 1, Cpad), lambda i: (0, 0, 0)),      # block-resident mask
            ],
            out_specs=pl.BlockSpec((block_b, Cpad), lambda i: (i, 0)),
        ),
        compiler_params=pltpu.CompilerParams(dimension_semantics=("parallel",)),
    )(x_win, wf, bf, mask)

    # TODO(synk): nn.Dropout(0.5) is identity in eval mode; training-mode dropout not implemented.
    # Tiny final Linear done once over the whole batch as a single XLA GEMM.
    return pooled @ fcw + fcb[None, :]


# --------------------------------------------------------------------------
# Pure-JAX reference (mirrors the PyTorch forward, eval mode)
# --------------------------------------------------------------------------
def ref_forward(x_emb, W2, b2, W3, b3, W4, b4, fcW, fcb):
    B, L, E = x_emb.shape
    feats = []
    for W, b in ((W2, b2), (W3, b3), (W4, b4)):
        Fn, k, _ = W.shape
        Lo = L - k + 1
        cols = []
        for t in range(Lo):
            win = x_emb[:, t:t + k, :].reshape(B, k * E)             # (B, k*E)
            cols.append(win @ W.reshape(Fn, k * E).T)                # (B, F)
        s = jnp.stack(cols, axis=2) + b[None, :, None]               # (B, F, Lo)
        s = jnp.maximum(s, 0.0)
        feats.append(jnp.max(s, axis=2))                             # (B, F)
    feat = jnp.concatenate(feats, axis=1)                            # (B, 3F)
    return feat @ fcW.T + fcb[None, :]


# --------------------------------------------------------------------------
if __name__ == "__main__":
    # Small, self-consistent shapes: vocab=20, pad_size(L)=16, embedding_dim(E)=32,
    # num_filters(F)=32, num_class(C)=4, batch(B)=32, batch block TB=16 -> grid=(2,).
    B, L, E, Fn, C, V = 32, 16, 32, 32, 4, 20

    key = jax.random.PRNGKey(0)
    keys = jax.random.split(key, 10)

    # Embedding table, padding_idx = V-1 zeroed (as nn.Embedding(padding_idx=...))
    emb = jax.random.normal(keys[0], (V, E), jnp.float32) * 0.1
    emb = emb.at[V - 1].set(0.0)

    W2 = jax.random.normal(keys[1], (Fn, 2, E), jnp.float32) * 0.1
    b2 = jax.random.normal(keys[2], (Fn,), jnp.float32) * 0.1
    W3 = jax.random.normal(keys[3], (Fn, 3, E), jnp.float32) * 0.1
    b3 = jax.random.normal(keys[4], (Fn,), jnp.float32) * 0.1
    W4 = jax.random.normal(keys[5], (Fn, 4, E), jnp.float32) * 0.1
    b4 = jax.random.normal(keys[6], (Fn,), jnp.float32) * 0.1
    fcW = jax.random.normal(keys[7], (C, 3 * Fn), jnp.float32) * 0.1
    fcb = jax.random.normal(keys[8], (C,), jnp.float32) * 0.1

    # Token ids (the PyTorch forward receives a tuple and uses x[0])
    token_ids = jax.random.randint(keys[9], (B, L), 0, V, jnp.int32)

    params = init_textcnn_params(emb, W2, b2, W3, b3, W4, b4, fcW, fcb, pad_idx=V - 1)
    out = jax.block_until_ready(textcnn_forward(token_ids, params, block_b=16))

    # Reference with the same bf16 rounding of the embedding table / conv weights
    # (f32 math, f32 biases/FC).
    r = lambda a: a.astype(jnp.bfloat16).astype(jnp.float32)
    x_emb_ref = r(emb)[token_ids]                                    # (B, L, E)
    ref = ref_forward(x_emb_ref, r(W2), b2, r(W3), b3, r(W4), b4, fcW, fcb)

    assert out.shape == (B, C)
    assert jnp.allclose(out, ref, atol=2e-3, rtol=2e-3), float(jnp.max(jnp.abs(out - ref)))

    print("KERNEL_OK")
</pallas_src>

<mosaic_0001>
module attributes {stable_mosaic.version = 11 : i64} {
  func.func @textcnn_conv_kernel(%arg0: i32, %arg1: memref<16x16x128xbf16, #tpu.memory_space<vmem>>, %arg2: memref<128x128xbf16, #tpu.memory_space<vmem>>, %arg3: memref<1x128xf32, #tpu.memory_space<vmem>>, %arg4: memref<3x1x128xf32, #tpu.memory_space<vmem>>, %arg5: memref<16x128xf32, #tpu.memory_space<vmem>>) attributes {dimension_semantics = [#tpu.dimension_semantics<parallel>], iteration_bounds = array<i64: 2>, scalar_prefetch = 0 : i64, scratch_operands = 0 : i64, tpu.core_type = #tpu.core_type<tc>, window_params = [{transform_indices = @transform_0, window_bounds = array<i64: 16, 16, 128>}, {pipeline_mode = #tpu.pipeline_mode<synchronous>, transform_indices = @transform_1, window_bounds = array<i64: 128, 128>}, {pipeline_mode = #tpu.pipeline_mode<synchronous>, transform_indices = @transform_2, window_bounds = array<i64: 1, 128>}, {pipeline_mode = #tpu.pipeline_mode<synchronous>, transform_indices = @transform_3, window_bounds = array<i64: 3, 1, 128>}, {transform_indices = @transform_4, window_bounds = array<i64: 16, 128>}]} {
    %c0 = arith.constant 0 : index
    %c0_0 = arith.constant 0 : index
    %c0_1 = arith.constant 0 : index
    %0 = vector.load %arg1[%c0, %c0_0, %c0_1] : memref<16x16x128xbf16, #tpu.memory_space<vmem>>, vector<16x16x128xbf16>
    %1 = vector.shape_cast %0 : vector<16x16x128xbf16> to vector<256x128xbf16>
    %c0_2 = arith.constant 0 : index
    %c0_3 = arith.constant 0 : index
    %2 = vector.load %arg2[%c0_2, %c0_3] : memref<128x128xbf16, #tpu.memory_space<vmem>>, vector<128x128xbf16>
    %cst = arith.constant dense<0.000000e+00> : vector<256x128xf32>
    %3 = tpu.matmul %1, %2, %cst {dimension_numbers = #tpu.dot_dimension_numbers<[1], [0], [0], [1], [0, 0, 1, 1], [], []>} : vector<256x128xbf16>, vector<128x128xbf16>, vector<256x128xf32> -> vector<256x128xf32>
    %4 = vector.shape_cast %3 : vector<256x128xf32> to vector<16x16x128xf32>
    %5 = vector.extract_strided_slice %4 {offsets = [0, 0, 0], sizes = [13, 16, 128], strides = [1, 1, 1]} : vector<16x16x128xf32> to vector<13x16x128xf32>
    %cst_4 = arith.constant dense<0xFF800000> : vector<16x128xf32>
    %6 = vector.multi_reduction <maximumf>, %5, %cst_4 [0] : vector<13x16x128xf32> to vector<16x128xf32>
    %7 = vector.extract_strided_slice %4 {offsets = [13, 0, 0], sizes = [3, 16, 128], strides = [1, 1, 1]} : vector<16x16x128xf32> to vector<3x16x128xf32>
    %c0_5 = arith.constant 0 : index
    %c0_6 = arith.constant 0 : index
    %c0_7 = arith.constant 0 : index
    %8 = vector.load %arg4[%c0_5, %c0_6, %c0_7] : memref<3x1x128xf32, #tpu.memory_space<vmem>>, vector<3x1x128xf32>
    %9 = vector.broadcast %8 : vector<3x1x128xf32> to vector<3x16x128xf32>
    %10 = arith.addf %7, %9 : vector<3x16x128xf32>
    %cst_8 = arith.constant dense<0xFF800000> : vector<16x128xf32>
    %11 = vector.multi_reduction <maximumf>, %10, %cst_8 [0] : vector<3x16x128xf32> to vector<16x128xf32>
    %12 = arith.maximumf %6, %11 : vector<16x128xf32>
    %c0_9 = arith.constant 0 : index
    %c0_10 = arith.constant 0 : index
    %13 = vector.load %arg3[%c0_9, %c0_10] : memref<1x128xf32, #tpu.memory_space<vmem>>, vector<1x128xf32>
    %14 = vector.broadcast %13 : vector<1x128xf32> to vector<16x128xf32>
    %15 = arith.addf %12, %14 : vector<16x128xf32>
    %cst_11 = arith.constant 0.000000e+00 : f32
    %16 = vector.broadcast %cst_11 : f32 to vector<16x128xf32>
    %17 = arith.maximumf %15, %16 : vector<16x128xf32>
    %c0_12 = arith.constant 0 : index
    %c0_13 = arith.constant 0 : index
    %18 = vector.load %arg5[%c0_12, %c0_13] : memref<16x128xf32, #tpu.memory_space<vmem>>, vector<16x128xf32>
    tpu.vector_store %arg5[%c0_12, %c0_13], %17 {strides = array<i32>} : memref<16x128xf32, #tpu.memory_space<vmem>>, vector<16x128xf32>,
    return
  }
  func.func @transform_0(%arg0: i32) -> (i32, i32, i32) {
    %c0_i32 = arith.constant 0 : i32
    %c0_i32_0 = arith.constant 0 : i32
    %c0_i32_1 = arith.constant 0 : i32
    return %c0_i32, %arg0, %c0_i32_0 : i32, i32, i32
  }
  func.func @transform_1(%arg0: i32) -> (i32, i32) {
    %c0_i32 = arith.constant 0 : i32
    %c0_i32_0 = arith.constant 0 : i32
    %c0_i32_1 = arith.constant 0 : i32
    return %c0_i32, %c0_i32_0 : i32, i32
  }
  func.func @transform_2(%arg0: i32) -> (i32, i32) {
    %c0_i32 = arith.constant 0 : i32
    %c0_i32_0 = arith.constant 0 : i32
    %c0_i32_1 = arith.constant 0 : i32
    return %c0_i32, %c0_i32_0 : i32, i32
  }
  func.func @transform_3(%arg0: i32) -> (i32, i32, i32) {
    %c0_i32 = arith.constant 0 : i32
    %c0_i32_0 = arith.constant 0 : i32
    %c0_i32_1 = arith.constant 0 : i32
    %c0_i32_2 = arith.constant 0 : i32
    return %c0_i32, %c0_i32_0, %c0_i32_1 : i32, i32, i32
  }
  func.func @transform_4(%arg0: i32) -> (i32, i32) {
    %c0_i32 = arith.constant 0 : i32
    %c0_i32_0 = arith.constant 0 : i32
    return %arg0, %c0_i32 : i32, i32
  }
}

</mosaic_0001>

<llo_original>
// kernel: tpu_custom_call.1
$region0: #{tpu_custom_call.1}
  #allocation0 [shape = 'u32[]', space=smem, size = 0x4, offset = 0x4, fixed_abs, tag = 'smem constant byte address 0x4 - core index']
  #allocation1 [shape = 'u32[144,128]{1,0:T(1,128)}', space=vmem, size = 0x12000, scoped, tag = 'internal scratch']
  #allocation8 [shape = 's32[]', space=sflag, size = 0x4, offset = 0, fixed_abs, tag = 'sflag constant byte address 0x0 - dummy sync flag']
  %s0 = inlined_call_operand.hbm [shape: bf16[16,32,128], index: 0, kind: input, shape index: {}]
  %s1 = inlined_call_operand.hbm [shape: bf16[128,128], index: 1, kind: input, shape index: {}]
  %s2 = inlined_call_operand.vmem [shape: f32[1,128], index: 2, kind: input, shape index: {}]
  %s3 = inlined_call_operand.vmem [shape: f32[3,1,128], index: 3, kind: input, shape index: {}]
  %s4 = inlined_call_operand.hbm [shape: f32[32,128], index: 4, kind: output, shape index: {}]
  %s5 = sld [smem:[#allocation0]]
  $region57: #{tpu_custom_call.1} parent=0
    _
  %s7 = ssub.s32 1, %s5
  %s8 = scalar_select 0, %s7, %s5
  $region1: #{tpu_custom_call.1} parent=0
    #allocation2 [shape = 'u8[131072]{0}', space=vmem, size = 0x20000, scoped, tag = 'input window, operand 0']
    #allocation3 [shape = 's32[2]{0}', space=sflag, size = 0x8, scoped, tag = 'scoped memory for tpu_custom_call.1']
    #allocation4 [shape = 's32[2]{0}', space=sflag, size = 0x8, scoped, tag = 'scoped memory for tpu_custom_call.1']
    #allocation5 [shape = 'u8[32768]{0}', space=vmem, size = 0x8000, scoped, tag = 'input window, operand 1, single buffered']
    #allocation6 [shape = 's32[1]{0}', space=sflag, size = 0x4, scoped, tag = 'scoped memory for tpu_custom_call.1']
    #allocation7 [shape = 'u8[16384]{0}', space=vmem, size = 0x4000, scoped, tag = 'output window, operand 0']
    %9 = vsyncpa [#allocation3], 0
    %s10 = scalar_lea.sflag [#allocation3], 1
    %11 = vsyncpa %s10, 0
    %12 = vsyncpa [#allocation6], 0
    %13 = vsyncpa [#allocation4], 0
    %s14 = scalar_lea.sflag [#allocation4], 1
    %15 = vsyncpa %s14, 0
    loop: start=0, step=1, limit=4
    $region2: #{tpu_custom_call.1} parent=1 // loop_pre_header
      _
    $region3: #{tpu_custom_call.1} parent=1 // loop_header
      %s17 = sphi 0, %s21
      %p18 = scmp.ge.s32.totalorder %s17, 4
      %s27 = sphi 0, %s29
      %s30 = sphi 0, %s27
      %s31 = sphi 0, %s30
      %s47 = sphi 0, %s31
      %s51 = sphi 0, %s51
      %s53 = sphi 0, %s51
      %s54 = sphi 0, %s53
      %s68 = sphi 0, %s54
      %s72 = sphi 0, %s72
      %s74 = sphi 0, %s72
      %s75 = sphi 0, %s74
      %s89 = sphi 0, %s75
      %s93 = sphi 0, %s93
      %s95 = sphi 0, %s93
      %s96 = sphi 0, %s95
      %s110 = sphi 0, %s96
      %s116 = sphi 0, %s118
      %s119 = sphi 0, %s116
      %s120 = sphi 0, %s119
      %s136 = sphi 0, %s120
    $region4: #{tpu_custom_call.1} parent=1 // loop_header_branch
      %20 = sbr.rel (%p18) target = $region8
    $region5: #{tpu_custom_call.1} parent=1 // loop_body
      %s22 = ssub.s32 %s17, 1
      %s23 = ssub.s32 %s17, 2
      %s24 = sadd.s32 %s17, 1
      %s25 = ssub.s32 %s17, %s24
      %p26 = scmp.eq.s32.totalorder %s25, 0
      %s28 = sadd.s32 %s27, 1
      %s29 = scalar_select %p26, %s27, %s28
      %p32 = pneg %p26
      %p33 = scmp.eq.s32.totalorder %s17, 1
      %p34 = por %p32, %p33
      %p35 = scmp.ne.s32.totalorder %s27, %s30
      %p36 = scmp.eq.s32.totalorder %s17, 0
      %p37 = por %p35, %p36
      %p38 = scmp.ne.s32.totalorder %s27, %s30
      %p39 = scmp.eq.s32.totalorder %s22, 1
      %p40 = por %p38, %p39
      %p41 = scmp.ne.s32.totalorder %s30, %s31
      %p42 = scmp.eq.s32.totalorder %s22, 0
      %p43 = por %p41, %p42
      %p44 = scmp.ne.s32.totalorder %s30, %s31
      %p45 = scmp.eq.s32.totalorder %s23, 1
      %p46 = por %p44, %p45
      %p48 = scmp.ne.s32.totalorder %s31, %s47
      %p49 = scmp.eq.s32.totalorder %s23, 0
      %p50 = por %p48, %p49
      %s52 = sadd.s32 %s51, 1
      %p55 = scmp.eq.s32.totalorder %s17, 1
      %p56 = scmp.ne.s32.totalorder %s51, %s53
      %p57 = scmp.eq.s32.totalorder %s17, 0
      %p58 = por %p56, %p57
      %p59 = scmp.ne.s32.totalorder %s51, %s53
      %p60 = scmp.eq.s32.totalorder %s22, 1
      %p61 = por %p59, %p60
      %p62 = scmp.ne.s32.totalorder %s53, %s54
      %p63 = scmp.eq.s32.totalorder %s22, 0
      %p64 = por %p62, %p63
      %p65 = scmp.ne.s32.totalorder %s53, %s54
      %p66 = scmp.eq.s32.totalorder %s23, 1
      %p67 = por %p65, %p66
      %p69 = scmp.ne.s32.totalorder %s54, %s68
      %p70 = scmp.eq.s32.totalorder %s23, 0
      %p71 = por %p69, %p70
      %s73 = sadd.s32 %s72, 1
      %p76 = scmp.eq.s32.totalorder %s17, 1
      %p77 = scmp.ne.s32.totalorder %s72, %s74
      %p78 = scmp.eq.s32.totalorder %s17, 0
      %p79 = por %p77, %p78
      %p80 = scmp.ne.s32.totalorder %s72, %s74
      %p81 = scmp.eq.s32.totalorder %s22, 1
      %p82 = por %p80, %p81
      %p83 = scmp.ne.s32.totalorder %s74, %s75
      %p84 = scmp.eq.s32.totalorder %s22, 0
      %p85 = por %p83, %p84
      %p86 = scmp.ne.s32.totalorder %s74, %s75
      %p87 = scmp.eq.s32.totalorder %s23, 1
      %p88 = por %p86, %p87
      %p90 = scmp.ne.s32.totalorder %s75, %s89
      %p91 = scmp.eq.s32.totalorder %s23, 0
      %p92 = por %p90, %p91
      %s94 = sadd.s32 %s93, 1
      %p97 = scmp.eq.s32.totalorder %s17, 1
      %p98 = scmp.ne.s32.totalorder %s93, %s95
      %p99 = scmp.eq.s32.totalorder %s17, 0
      %p100 = por %p98, %p99
      %p101 = scmp.ne.s32.totalorder %s93, %s95
      %p102 = scmp.eq.s32.totalorder %s22, 1
      %p103 = por %p101, %p102
      %p104 = scmp.ne.s32.totalorder %s95, %s96
      %p105 = scmp.eq.s32.totalorder %s22, 0
      %p106 = por %p104, %p105
      %p107 = scmp.ne.s32.totalorder %s95, %s96
      %p108 = scmp.eq.s32.totalorder %s23, 1
      %p109 = por %p107, %p108
      %p111 = scmp.ne.s32.totalorder %s96, %s110
      %p112 = scmp.eq.s32.totalorder %s23, 0
      %p113 = por %p111, %p112
      %s114 = ssub.s32 %s17, %s24
      %p115 = scmp.eq.s32.totalorder %s114, 0
      %s117 = sadd.s32 %s116, 1
      %s118 = scalar_select %p115, %s116, %s117
      %p121 = pneg %p115
      %p122 = scmp.eq.s32.totalorder %s17, 1
      %p123 = por %p121, %p122
      %p124 = scmp.ne.s32.totalorder %s116, %s119
      %p125 = scmp.eq.s32.totalorder %s17, 0
      %p126 = por %p124, %p125
      %p127 = scmp.ne.s32.totalorder %s116, %s119
      %p128 = scmp.eq.s32.totalorder %s22, 1
      %p129 = por %p127, %p128
      %p130 = scmp.ne.s32.totalorder %s119, %s120
      %p131 = scmp.eq.s32.totalorder %s22, 0
      %p132 = por %p130, %p131
      %p133 = scmp.ne.s32.totalorder %s119, %s120
      %p134 = scmp.eq.s32.totalorder %s23, 1
      %p135 = por %p133, %p134
      %p137 = scmp.ne.s32.totalorder %s120, %s136
      %p138 = scmp.eq.s32.totalorder %s23, 0
      %p139 = por %p137, %p138
      %p140 = scmp.le.s32.totalorder 1, %s17
      %p141 = scmp.lt.s32.totalorder %s17, 3
      %p142 = pnand %p140, %p141
      %p143 = pneg %p142
      // Predicated region
      $region9: #{tpu_custom_call.1} parent=5 // pred_check
        _
      $region10: #{tpu_custom_call.1} parent=5 // pred_check_branch
        %145 = sbr.rel (%p142) target = $region12
      $region11: #{tpu_custom_call.1} parent=5 // pred_region
        %s146 = ssub.s32 %s17, 1
        // Predicated region
        $region13: #{tpu_custom_call.1} parent=11 // pred_check
          %p147 = pneg %p64
        $region14: #{tpu_custom_call.1} parent=11 // pred_check_branch
          %149 = sbr.rel (%p147) target = $region16
        $region15: #{tpu_custom_call.1} parent=11 // pred_region
          %s151 = ssub.s32 1024, 1024
          %152 = vsyncadd [#allocation6], %s151
          %s153 = sshll.u32 [#allocation5], 4
          %s154 = int_to_ptr.vmem [resolvable:$true] %s153
          %159 = dma.hbm_to_vmem [thread:$0]  %s1, 1024, %s154, [#allocation6], 64, 64, 4
        $region16: #{tpu_custom_call.1} parent=11 // pred_fallthru
          _
        // Predicated region
        $region17: #{tpu_custom_call.1} parent=11 // pred_check
          %p160 = pneg %p85
        $region18: #{tpu_custom_call.1} parent=11 // pred_check_branch
          %162 = sbr.rel (%p160) target = $region20
        $region19: #{tpu_custom_call.1} parent=11 // pred_region
          _
        $region20: #{tpu_custom_call.1} parent=11 // pred_fallthru
          _
        // Predicated region
        $region21: #{tpu_custom_call.1} parent=11 // pred_check
          %p163 = pneg %p106
        $region22: #{tpu_custom_call.1} parent=11 // pred_check_branch
          %165 = sbr.rel (%p163) target = $region24
        $region23: #{tpu_custom_call.1} parent=11 // pred_region
          _
        $region24: #{tpu_custom_call.1} parent=11 // pred_fallthru
          _
      $region12: #{tpu_custom_call.1} parent=5 // pred_fallthru
        _
      %p166 = scmp.lt.s32.totalorder %s17, 2
      // Predicated region
      $region25: #{tpu_custom_call.1} parent=5 // pred_check
        %p167 = pneg %p166
      $region26: #{tpu_custom_call.1} parent=5 // pred_check_branch
        %169 = sbr.rel (%p167) target = $region28
      $region27: #{tpu_custom_call.1} parent=5 // pred_region
        // Predicated region
        $region29: #{tpu_custom_call.1} parent=27 // pred_check
          %p170 = pneg %p37
        $region30: #{tpu_custom_call.1} parent=27 // pred_check_branch
          %172 = sbr.rel (%p170) target = $region32
        $region31: #{tpu_custom_call.1} parent=27 // pred_region
          #allocation9 [shape = 'u32[6]{0}', space=smem, size = 0x18, scoped, tag = 'DMA stride descriptor']
          %s173 = sand.u32 %s27, 1
          %s174 = scalar_lea.sflag [#allocation3], %s173
          %s175 = sand.u32 %s27, 1
          %s176 = smul.addr %s175, 128
          %s177 = scalar_lea.vmem [#allocation2], %s176
          %s178 = smul.u32 2, %s17
          %s180 = ssub.s32 2048, 2048
          %181 = vsyncadd %s174, %s180
          %s182 = smul.addr %s178, 64
          %s183 = scalar_lea.hbm %s0, %s182
          %s185 = sshll.u32 1, 14
          %s186 = sxor.u32 4294967295, %s185
          %s188 = sld [smem:[#allocation0]]
          %s189 = sadd.s32 2, %s188
          %s191 = sshll.u32 7, 26
          %s192 = sxor.u32 4294967295, %s191
          %s193 = sand.u32 0, %s192
          %s194 = sshll.u32 %s189, 26
          %s195 = sor.u32 %s193, %s194
          %s196 = sshll.u32 %s177, 4
          %s197 = int_to_ptr.vmem [resolvable:$true] %s196
          %203 = sst [smem:[#allocation9]] 256
          %s204 = scalar_lea.smem [#allocation9], 1
          %205 = sst [smem:[%s204]] 128
          %s206 = scalar_lea.smem [#allocation9], 2
          %207 = sst [smem:[%s206]] 2
          %s208 = scalar_lea.smem [#allocation9], 3
          %209 = sst [smem:[%s208]] 64
          %s210 = scalar_lea.smem [#allocation9], 4
          %211 = sst [smem:[%s210]] 64
          %s212 = scalar_lea.smem [#allocation9], 5
          %213 = sst [smem:[%s212]] 4
          %215 = dma.general %s183, 2048, %s197, %s174, [#allocation8], [#allocation9], %s195, 0
        $region32: #{tpu_custom_call.1} parent=27 // pred_fallthru
          _
      $region28: #{tpu_custom_call.1} parent=5 // pred_fallthru
        _
      %p216 = scmp.le.s32.totalorder 1, %s17
      %p217 = scmp.lt.s32.totalorder %s17, 3
      %p218 = pnand %p216, %p217
      %p219 = pneg %p218
      // Predicated region
      $region33: #{tpu_custom_call.1} parent=5 // pred_check
        _
      $region34: #{tpu_custom_call.1} parent=5 // pred_check_branch
        %221 = sbr.rel (%p218) target = $region36
      $region35: #{tpu_custom_call.1} parent=5 // pred_region
        %s222 = ssub.s32 %s17, 1
        %s223 = sand.u32 %s30, 1
        %s224 = scalar_lea.sflag [#allocation3], %s223
        %s225 = sand.u32 %s30, 1
        %s226 = smul.addr %s225, 128
        %s227 = scalar_lea.vmem [#allocation2], %s226
        // Predicated region
        $region37: #{tpu_custom_call.1} parent=35 // pred_check
          %p228 = pneg %p43
        $region38: #{tpu_custom_call.1} parent=35 // pred_check_branch
          %230 = sbr.rel (%p228) target = $region40
        $region39: #{tpu_custom_call.1} parent=35 // pred_region
          %231 = dma.done %s224, 2048
        $region40: #{tpu_custom_call.1} parent=35 // pred_fallthru
          _
        // Predicated region
        $region41: #{tpu_custom_call.1} parent=35 // pred_check
          %p232 = pneg %p64
        $region42: #{tpu_custom_call.1} parent=35 // pred_check_branch
          %234 = sbr.rel (%p232) target = $region44
        $region43: #{tpu_custom_call.1} parent=35 // pred_region
          %235 = dma.done [#allocation6], 1024
        $region44: #{tpu_custom_call.1} parent=35 // pred_fallthru
          _
        %s236 = sand.u32 %s30, 1
        %s237 = scalar_lea.sflag [#allocation3], %s236
        %s238 = sand.u32 %s30, 1
        %s239 = smul.addr %s238, 128
        %s240 = scalar_lea.vmem [#allocation2], %s239
        %p241 = pneg %p43
        %p242 = pneg %p40
        %p243 = pneg %p64
        %p244 = pneg %p61
        %p245 = pneg %p85
        %p246 = pneg %p82
        %p247 = pneg %p106
        %p248 = pneg %p103
        %p249 = pneg %p132
        %p250 = pneg %p129
        %s251 = sand.u32 %s119, 1
        %s252 = scalar_lea.sflag [#allocation4], %s251
        %s253 = sand.u32 %s119, 1
        %s254 = smul.addr %s253, 16
        %s255 = scalar_lea.vmem [#allocation7], %s254
        %s256 = smul.u32 2, %s22
        %s257 = smul.u32 2, %s22
        %v259 = vld [vmem:[%s227] sm:$0xf]
        %v260 = vld [vmem:[%s227 + $0x4] sm:$0xf]
        %v261 = vld [vmem:[%s227 + $0x8] sm:$0xf]
        %v262 = vld [vmem:[%s227 + $0xc] sm:$0xf]
        %v263 = vld [vmem:[%s227 + $0x10] sm:$0xf]
        %v264 = vld [vmem:[%s227 + $0x14] sm:$0xf]
        %v265 = vld [vmem:[%s227 + $0x18] sm:$0xf]
        %v266 = vld [vmem:[%s227 + $0x1c] sm:$0xf]
        %v267 = vld [vmem:[%s227 + $0x20] sm:$0xf]
        %v268 = vld [vmem:[%s227 + $0x24] sm:$0xf]
        %v269 = vld [vmem:[%s227 + $0x28] sm:$0xf]
        %v270 = vld [vmem:[%s227 + $0x2c] sm:$0xf]
        %v271 = vld [vmem:[%s227 + $0x30] sm:$0xf]
        %v272 = vld [vmem:[%s227 + $0x34] sm:$0xf]
        %v273 = vld [vmem:[%s227 + $0x38] sm:$0xf]
        %v274 = vld [vmem:[%s227 + $0x3c] sm:$0xf]
        %v275 = vld [vmem:[%s227 + $0x40] sm:$0xf]
        %v276 = vld [vmem:[%s227 + $0x44] sm:$0xf]
        %v277 = vld [vmem:[%s227 + $0x48] sm:$0xf]
        %v278 = vld [vmem:[%s227 + $0x4c] sm:$0xf]
        %v279 = vld [vmem:[%s227 + $0x50] sm:$0xf]
        %v280 = vld [vmem:[%s227 + $0x54] sm:$0xf]
        %v281 = vld [vmem:[%s227 + $0x58] sm:$0xf]
        %v282 = vld [vmem:[%s227 + $0x5c] sm:$0xf]
        %v283 = vld [vmem:[%s227 + $0x60] sm:$0xf]
        %v284 = vld [vmem:[%s227 + $0x64] sm:$0xf]
        %v285 = vld [vmem:[%s227 + $0x68] sm:$0xf]
        %v286 = vld [vmem:[%s227 + $0x6c] sm:$0xf]
        %v287 = vld [vmem:[%s227 + $0x70] sm:$0xf]
        %v288 = vld [vmem:[%s227 + $0x74] sm:$0xf]
        %v289 = vld [vmem:[%s227 + $0x78] sm:$0xf]
        %v290 = vld [vmem:[%s227 + $0x7c] sm:$0xf]
        %v291 = vld [vmem:[#allocation5] sm:$0xf]
        %v292 = vld [vmem:[#allocation5 + $0x4] sm:$0xf]
        %v293 = vld [vmem:[#allocation5 + $0x8] sm:$0xf]
        %v294 = vld [vmem:[#allocation5 + $0xc] sm:$0xf]
        %v295 = vld [vmem:[#allocation5 + $0x10] sm:$0xf]
        %v296 = vld [vmem:[#allocation5 + $0x14] sm:$0xf]
        %v297 = vld [vmem:[#allocation5 + $0x18] sm:$0xf]
        %v298 = vld [vmem:[#allocation5 + $0x1c] sm:$0xf]
        %v299 = vld [vmem:[#allocation5 + $0x20] sm:$0xf]
        %v300 = vld [vmem:[#allocation5 + $0x24] sm:$0xf]
        %v301 = vld [vmem:[#allocation5 + $0x28] sm:$0xf]
        %v302 = vld [vmem:[#allocation5 + $0x2c] sm:$0xf]
        %v303 = vld [vmem:[#allocation5 + $0x30] sm:$0xf]
        %v304 = vld [vmem:[#allocation5 + $0x34] sm:$0xf]
        %v305 = vld [vmem:[#allocation5 + $0x38] sm:$0xf]
        %v306 = vld [vmem:[#allocation5 + $0x3c] sm:$0xf]
        %v339 = vunpack.c.l.b16 %v259
        %v340 = vunpack.c.l.b16 %v260
        %v341 = vunpack.c.l.b16 %v261
        %v342 = vunpack.c.l.b16 %v262
        %v343 = vunpack.c.l.b16 %v263
        %v344 = vunpack.c.l.b16 %v264
        %v345 = vunpack.c.l.b16 %v265
        %v346 = vunpack.c.l.b16 %v266
        %v347 = vunpack.c.l.b16 %v267
        %v348 = vunpack.c.l.b16 %v268
        %v349 = vunpack.c.l.b16 %v269
        %v350 = vunpack.c.l.b16 %v270
        %v351 = vunpack.c.l.b16 %v271
        %v352 = vunpack.c.l.b16 %v272
        %v353 = vunpack.c.l.b16 %v273
        %v354 = vunpack.c.l.b16 %v274
        %v355 = vunpack.c.l.b16 %v275
        %v356 = vunpack.c.l.b16 %v276
        %v357 = vunpack.c.l.b16 %v277
        %v358 = vunpack.c.l.b16 %v278
        %v359 = vunpack.c.l.b16 %v279
        %v360 = vunpack.c.l.b16 %v280
        %v361 = vunpack.c.l.b16 %v281
        %v362 = vunpack.c.l.b16 %v282
        %v363 = vunpack.c.l.b16 %v283
        %v364 = vunpack.c.l.b16 %v284
        %v365 = vunpack.c.l.b16 %v285
        %v366 = vunpack.c.l.b16 %v286
        %v367 = vunpack.c.l.b16 %v287
        %v368 = vunpack.c.l.b16 %v288
        %v369 = vunpack.c.l.b16 %v289
        %v370 = vunpack.c.l.b16 %v290
        %v371 = vpack.c.b16 %v340, %v339
        %v372 = vpack.c.b16 %v342, %v341
        %v373 = vpack.c.b16 %v344, %v343
        %v374 = vpack.c.b16 %v346, %v345
        %v375 = vpack.c.b16 %v348, %v347
        %v376 = vpack.c.b16 %v350, %v349
        %v377 = vpack.c.b16 %v352, %v351
        %v378 = vpack.c.b16 %v354, %v353
        %v379 = vpack.c.b16 %v356, %v355
        %v380 = vpack.c.b16 %v358, %v357
        %v381 = vpack.c.b16 %v360, %v359
        %v382 = vpack.c.b16 %v362, %v361
        %v383 = vpack.c.b16 %v364, %v363
        %v384 = vpack.c.b16 %v366, %v365
        %v385 = vpack.c.b16 %v368, %v367
        %v386 = vpack.c.b16 %v370, %v369
        %v419 = vunpack.c.l.b16 %v291
        %v420 = vunpack.c.l.b16 %v292
        %v421 = vunpack.c.l.b16 %v293
        %v422 = vunpack.c.l.b16 %v294
        %v423 = vunpack.c.l.b16 %v295
        %v424 = vunpack.c.l.b16 %v296
        %v425 = vunpack.c.l.b16 %v297
        %v426 = vunpack.c.l.b16 %v298
        %v427 = vunpack.c.l.b16 %v299
        %v428 = vunpack.c.l.b16 %v300
        %v429 = vunpack.c.l.b16 %v301
        %v430 = vunpack.c.l.b16 %v302
        %v431 = vunpack.c.l.b16 %v303
        %v432 = vunpack.c.l.b16 %v304
        %v433 = vunpack.c.l.b16 %v305
        %v434 = vunpack.c.l.b16 %v306
        %v435 = vpack.c.b16 %v420, %v419
        %v436 = vpack.c.b16 %v422, %v421
        %v437 = vpack.c.b16 %v424, %v423
        %v438 = vpack.c.b16 %v426, %v425
        %v439 = vpack.c.b16 %v428, %v427
        %v440 = vpack.c.b16 %v430, %v429
        %v441 = vpack.c.b16 %v432, %v431
        %v442 = vpack.c.b16 %v434, %v433
        %451 = vmatprep.subr.bf16.mxu0 0
        %452 = vmatpush1.bf16.msra.mxu0 %v435
        %453 = vmatprep.subr.bf16.mxu0 0
        %454 = vmatpush1.bf16.msra.mxu0 %v436
        %455 = vmatprep.subr.bf16.mxu0 0
        %456 = vmatpush1.bf16.msra.mxu0 %v437
        %457 = vmatprep.subr.bf16.mxu0 0
        %458 = vmatpush1.bf16.msra.mxu0 %v438
        %459 = vmatprep.subr.bf16.mxu0 0
        %460 = vmatpush1.bf16.msra.mxu0 %v439
        %461 = vmatprep.subr.bf16.mxu0 0
        %462 = vmatpush1.bf16.msra.mxu0 %v440
        %463 = vmatprep.subr.bf16.mxu0 0
        %464 = vmatpush1.bf16.msra.mxu0 %v441
        %465 = vmatprep.subr.bf16.mxu0 0
        %466 = vmatpush1.bf16.msra.mxu0 %v442
        %467 = vmatprep.subr.bf16.mxu0 0
        %468 = vmatpush1.bf16.msra.mxu0 0
        %469 = vmatprep.subr.bf16.mxu0 0
        %470 = vmatpush1.bf16.msra.mxu0 0
        %471 = vmatprep.subr.bf16.mxu0 0
        %472 = vmatpush1.bf16.msra.mxu0 0
        %473 = vmatprep.subr.bf16.mxu0 0
        %474 = vmatpush1.bf16.msra.mxu0 0
        %475 = vmatprep.subr.bf16.mxu0 0
        %476 = vmatpush1.bf16.msra.mxu0 0
        %477 = vmatprep.subr.bf16.mxu0 0
        %478 = vmatpush1.bf16.msra.mxu0 0
        %479 = vmatprep.subr.bf16.mxu0 0
        %480 = vmatpush1.bf16.msra.mxu0 0
        %481 = vmatprep.subr.bf16.mxu0 0
        %482 = vmatpush1.bf16.msra.mxu0 0
        %483 = vmatprep.mubr.bf16.mxu0 0
        %484 = vmatmul.mubr.bf16.gmra.mrb[0].mxu0 %v371
        %v485 = vpop.f32.mrb[0].mxu0
        %v486 = vadd.f32 0.0, %v485
        %v487 = vpop.f32.mrb[0].mxu0
        %v488 = vpop.f32.mrb[0].mxu0
        %v489 = vadd.f32 0.0, %v488
        %v490 = vpop.f32.mrb[0].mxu0
        %491 = vmatprep.mubr.bf16.mxu0 0
        %492 = vmatmul.mubr.bf16.gmra.mrb[0].mxu0 %v372
        %v493 = vpop.f32.mrb[0].mxu0
        %v494 = vadd.f32 0.0, %v493
        %v495 = vpop.f32.mrb[0].mxu0
        %v496 = vpop.f32.mrb[0].mxu0
        %v497 = vadd.f32 0.0, %v496
        %v498 = vpop.f32.mrb[0].mxu0
        %499 = vmatprep.mubr.bf16.mxu0 0
        %500 = vmatmul.mubr.bf16.gmra.mrb[0].mxu0 %v373
        %v501 = vpop.f32.mrb[0].mxu0
        %v502 = vadd.f32 0.0, %v501
        %v503 = vpop.f32.mrb[0].mxu0
        %v504 = vpop.f32.mrb[0].mxu0
        %v505 = vadd.f32 0.0, %v504
        %v506 = vpop.f32.mrb[0].mxu0
        %507 = vmatprep.mubr.bf16.mxu0 0
        %508 = vmatmul.mubr.bf16.gmra.mrb[0].mxu0 %v374
        %v509 = vpop.f32.mrb[0].mxu0
        %v510 = vadd.f32 0.0, %v509
        %v511 = vpop.f32.mrb[0].mxu0
        %v512 = vpop.f32.mrb[0].mxu0
        %v513 = vadd.f32 0.0, %v512
        %v514 = vpop.f32.mrb[0].mxu0
        %515 = vmatprep.mubr.bf16.mxu0 0
        %516 = vmatmul.mubr.bf16.gmra.mrb[0].mxu0 %v375
        %v517 = vpop.f32.mrb[0].mxu0
        %v518 = vadd.f32 0.0, %v517
        %v519 = vpop.f32.mrb[0].mxu0
        %v520 = vpop.f32.mrb[0].mxu0
        %v521 = vadd.f32 0.0, %v520
        %v522 = vpop.f32.mrb[0].mxu0
        %523 = vmatprep.mubr.bf16.mxu0 0
        %524 = vmatmul.mubr.bf16.gmra.mrb[0].mxu0 %v376
        %v525 = vpop.f32.mrb[0].mxu0
        %v526 = vadd.f32 0.0, %v525
        %v527 = vpop.f32.mrb[0].mxu0
        %v528 = vpop.f32.mrb[0].mxu0
        %v529 = vadd.f32 0.0, %v528
        %v530 = vpop.f32.mrb[0].mxu0
        %531 = vmatprep.mubr.bf16.mxu0 0
        %532 = vmatmul.mubr.bf16.gmra.mrb[0].mxu0 %v377
        %v533 = vpop.f32.mrb[0].mxu0
        %v534 = vadd.f32 0.0, %v533
        %v535 = vpop.f32.mrb[0].mxu0
        %v536 = vpop.f32.mrb[0].mxu0
        %v537 = vadd.f32 0.0, %v536
        %v538 = vpop.f32.mrb[0].mxu0
        %539 = vmatprep.mubr.bf16.mxu0 0
        %540 = vmatmul.mubr.bf16.gmra.mrb[0].mxu0 %v378
        %v541 = vpop.f32.mrb[0].mxu0
        %v542 = vadd.f32 0.0, %v541
        %v543 = vpop.f32.mrb[0].mxu0
        %v544 = vpop.f32.mrb[0].mxu0
        %v545 = vadd.f32 0.0, %v544
        %v546 = vpop.f32.mrb[0].mxu0
        %547 = vmatprep.mubr.bf16.mxu0 0
        %548 = vmatmul.mubr.bf16.gmra.mrb[0].mxu0 %v379
        %v549 = vpop.f32.mrb[0].mxu0
        %v550 = vadd.f32 0.0, %v549
        %v551 = vpop.f32.mrb[0].mxu0
        %v552 = vpop.f32.mrb[0].mxu0
        %v553 = vadd.f32 0.0, %v552
        %v554 = vpop.f32.mrb[0].mxu0
        %555 = vmatprep.mubr.bf16.mxu0 0
        %556 = vmatmul.mubr.bf16.gmra.mrb[0].mxu0 %v380
        %v557 = vpop.f32.mrb[0].mxu0
        %v558 = vadd.f32 0.0, %v557
        %v559 = vpop.f32.mrb[0].mxu0
        %v560 = vpop.f32.mrb[0].mxu0
        %v561 = vadd.f32 0.0, %v560
        %v562 = vpop.f32.mrb[0].mxu0
        %563 = vmatprep.mubr.bf16.mxu0 0
        %564 = vmatmul.mubr.bf16.gmra.mrb[0].mxu0 %v381
        %v565 = vpop.f32.mrb[0].mxu0
        %v566 = vadd.f32 0.0, %v565
        %v567 = vpop.f32.mrb[0].mxu0
        %v568 = vpop.f32.mrb[0].mxu0
        %v569 = vadd.f32 0.0, %v568
        %v570 = vpop.f32.mrb[0].mxu0
        %571 = vmatprep.mubr.bf16.mxu0 0
        %572 = vmatmul.mubr.bf16.gmra.mrb[0].mxu0 %v382
        %v573 = vpop.f32.mrb[0].mxu0
        %v574 = vadd.f32 0.0, %v573
        %v575 = vpop.f32.mrb[0].mxu0
        %v576 = vpop.f32.mrb[0].mxu0
        %v577 = vadd.f32 0.0, %v576
        %v578 = vpop.f32.mrb[0].mxu0
        %579 = vmatprep.mubr.bf16.mxu0 0
        %580 = vmatmul.mubr.bf16.gmra.mrb[0].mxu0 %v383
        %v581 = vpop.f32.mrb[0].mxu0
        %v582 = vadd.f32 0.0, %v581
        %v583 = vpop.f32.mrb[0].mxu0
        %v584 = vpop.f32.mrb[0].mxu0
        %v585 = vadd.f32 0.0, %v584
        %v586 = vpop.f32.mrb[0].mxu0
        %587 = vmatprep.mubr.bf16.mxu0 0
        %588 = vmatmul.mubr.bf16.gmra.mrb[0].mxu0 %v384
        %v589 = vpop.f32.mrb[0].mxu0
        %v590 = vadd.f32 0.0, %v589
        %v591 = vpop.f32.mrb[0].mxu0
        %v592 = vpop.f32.mrb[0].mxu0
        %v593 = vadd.f32 0.0, %v592
        %v594 = vpop.f32.mrb[0].mxu0
        %595 = vmatprep.mubr.bf16.mxu0 0
        %596 = vmatmul.mubr.bf16.gmra.mrb[0].mxu0 %v385
        %v597 = vpop.f32.mrb[0].mxu0
        %v598 = vadd.f32 0.0, %v597
        %v599 = vpop.f32.mrb[0].mxu0
        %v600 = vpop.f32.mrb[0].mxu0
        %v601 = vadd.f32 0.0, %v600
        %v602 = vpop.f32.mrb[0].mxu0
        %603 = vmatprep.mubr.bf16.mxu0 0
        %604 = vmatmul.mubr.bf16.gmra.mrb[0].mxu0 %v386
        %v605 = vpop.f32.mrb[0].mxu0
        %v606 = vadd.f32 0.0, %v605
        %v607 = vpop.f32.mrb[0].mxu0
        %v608 = vpop.f32.mrb[0].mxu0
        %v609 = vadd.f32 0.0, %v608
        %v610 = vpop.f32.mrb[0].mxu0
        %611 = vdwg.mxu0
        %v612 = vmax.f32 %v486, %v502
        %v613 = vmax.f32 %v494, %v510
        %v614 = vmax.f32 %v612, %v518
        %v615 = vmax.f32 %v613, %v526
        %v616 = vmax.f32 %v614, %v534
        %v617 = vmax.f32 %v615, %v542
        %v618 = vmax.f32 %v616, %v550
        %v619 = vmax.f32 %v617, %v558
        %v620 = vmax.f32 %v618, %v566
        %v621 = vmax.f32 %v619, %v574
        %v622 = vmax.f32 %v620, %v582
        %v623 = vmax.f32 %v622, %v621
        %v624 = vmax.f32 %v489, %v505
        %v625 = vmax.f32 %v497, %v513
        %v626 = vmax.f32 %v624, %v521
        %v627 = vmax.f32 %v625, %v529
        %v628 = vmax.f32 %v626, %v537
        %v629 = vmax.f32 %v627, %v545
        %v630 = vmax.f32 %v628, %v553
        %v631 = vmax.f32 %v629, %v561
        %v632 = vmax.f32 %v630, %v569
        %v633 = vmax.f32 %v631, %v577
        %v634 = vmax.f32 %v632, %v585
        %v635 = vmax.f32 %v634, %v633
        %v636 = vld [vmem:[%s3] sm:$0x1]
        %v637 = vld [vmem:[%s3 + $0x1] sm:$0x1]
        %v638 = vld [vmem:[%s3 + $0x2] sm:$0x1]
        %v642 = vlaneseq
        %v643 = vshrl.u32 %v642, 7
        %v644 = vsub.s32 0, %v643
        %v645 = vrot.slane %v636, %v644
        %v646 = vlaneseq
        %v647 = vshrl.u32 %v646, 7
        %v648 = vsub.s32 0, %v647
        %v649 = vrot.slane %v637, %v648
        %v650 = vlaneseq
        %v651 = vshrl.u32 %v650, 7
        %v652 = vsub.s32 0, %v651
        %v653 = vrot.slane %v638, %v652
        %v657 = vadd.f32 %v590, %v645
        %v658 = vadd.f32 %v593, %v645
        %v659 = vadd.f32 %v598, %v649
        %v660 = vadd.f32 %v601, %v649
        %v661 = vadd.f32 %v606, %v653
        %v662 = vadd.f32 %v609, %v653
        %v663 = vmax.f32 %v657, %v661
        %v664 = vmax.f32 %v663, %v659
        %v665 = vmax.f32 %v658, %v662
        %v666 = vmax.f32 %v665, %v660
        %v667 = vmax.f32 %v623, %v664
        %v668 = vmax.f32 %v635, %v666
        %v669 = vld [vmem:[%s2] sm:$0x1]
        %v671 = vlaneseq
        %v672 = vshrl.u32 %v671, 7
        %v673 = vsub.s32 0, %v672
        %v674 = vrot.slane %v669, %v673
        %v676 = vadd.f32 %v667, %v674
        %v677 = vadd.f32 %v668, %v674
        %v678 = vmax.f32 %v676, 0.0
        %v679 = vmax.f32 %v677, 0.0
        %680 = vst [vmem:[%s255] sm:$0xff] %v678
        %681 = vst [vmem:[%s255 + $0x8] sm:$0xff] %v679
        %s682 = sand.u32 %s119, 1
        %s683 = scalar_lea.sflag [#allocation4], %s682
        %s684 = sand.u32 %s119, 1
        %s685 = smul.addr %s684, 16
        %s686 = scalar_lea.vmem [#allocation7], %s685
        // Predicated region
        $region45: #{tpu_custom_call.1} parent=35 // pred_check
          %p687 = pneg %p129
        $region46: #{tpu_custom_call.1} parent=35 // pred_check_branch
          %689 = sbr.rel (%p687) target = $region48
        $region47: #{tpu_custom_call.1} parent=35 // pred_region
          %s690 = smul.u32 2, %s22
          %s692 = ssub.s32 256, 256
          %693 = vsyncadd %s683, %s692
          %s694 = smul.addr %s690, 128
          %s695 = scalar_lea.hbm %s4, %s694
          %s696 = sshll.u32 %s686, 4
          %s697 = int_to_ptr.vmem [resolvable:$true] %s696
          %702 = dma.vmem_to_hbm [thread:$0]  %s697, 256, %s695, %s683, 128, 128, 8
        $region48: #{tpu_custom_call.1} parent=35 // pred_fallthru
          _
      $region36: #{tpu_custom_call.1} parent=5 // pred_fallthru
        _
      %p703 = scmp.le.s32.totalorder 2, %s17
      // Predicated region
      $region49: #{tpu_custom_call.1} parent=5 // pred_check
        %p704 = pneg %p703
      $region50: #{tpu_custom_call.1} parent=5 // pred_check_branch
        %706 = sbr.rel (%p704) target = $region52
      $region51: #{tpu_custom_call.1} parent=5 // pred_region
        %s707 = ssub.s32 %s17, 2
        // Predicated region
        $region53: #{tpu_custom_call.1} parent=51 // pred_check
          %p708 = pneg %p135
        $region54: #{tpu_custom_call.1} parent=51 // pred_check_branch
          %710 = sbr.rel (%p708) target = $region56
        $region55: #{tpu_custom_call.1} parent=51 // pred_region
          %s711 = sand.u32 %s120, 1
          %s712 = scalar_lea.sflag [#allocation4], %s711
          %s713 = sand.u32 %s120, 1
          %s714 = smul.addr %s713, 16
          %s715 = scalar_lea.vmem [#allocation7], %s714
          %716 = dma.done %s712, 256
        $region56: #{tpu_custom_call.1} parent=51 // pred_fallthru
          _
      $region52: #{tpu_custom_call.1} parent=5 // pred_fallthru
        _
    $region6: #{tpu_custom_call.1} parent=1 // loop_footer
      %s21 = sadd.s32 1, %s17
    $region7: #{tpu_custom_call.1} parent=1 // loop_footer_branch
      %16 = sbr.rel target = $region3
    $region8: #{tpu_custom_call.1} parent=1 // loop_exit
      _
    %717 = vsyncpa [#allocation3], 1
    %s718 = scalar_lea.sflag [#allocation3], 1
    %719 = vsyncpa %s718, 1
    %720 = vsyncpa [#allocation6], 1
    %721 = vsyncpa [#allocation4], 1
    %s722 = scalar_lea.sflag [#allocation4], 1
    %723 = vsyncpa %s722, 1

</llo_original>
